<compile_context>
chip_gen: v7x
topology: tpu7x:2x2x1
jax: 0.10.0
libtpu: 0.0.40
codegen_flags: <defaults>
</compile_context>

<pallas_src>
import functools

import jax
import jax.numpy as jnp
from jax import lax
from jax.experimental import pallas as pl
from jax.experimental.pallas import tpu as pltpu

LAMBDA_LAP = 0.1
BETA_GRAD = 0.05

_LANES = 128
_SUBLANES = 8
_VREG = _SUBLANES * _LANES            # 1024 points per full f32 vreg
_DEFAULT_TILE_POINTS = 131072         # 3.5 MiB of input per grid step (f32)

# ----------------- deterministic synthetic density network -----------------
# TODO(synk): torch.autograd.grad(densities, points) differentiates through an
# arbitrary upstream density network; there is no Pallas equivalent, so a fixed
# synthetic density MLP + JAX autodiff stands in for that graph (glue code).
_HID = 16
_k1, _k2 = jax.random.split(jax.random.PRNGKey(42))
_W1 = jax.random.normal(_k1, (3, _HID), jnp.float32) * 0.5
_B1 = jnp.linspace(-0.3, 0.3, _HID, dtype=jnp.float32)
_W2 = jax.random.normal(_k2, (_HID, 1), jnp.float32) * 0.5
_B2 = jnp.float32(0.1)


def density_fn(p):  # p: [3] -> scalar density
    h = jnp.tanh(p @ _W1 + _B1)
    return (h @ _W2)[0] + _B2


def _round_up(x, m):
    return (x + m - 1) // m * m


def _autodiff_fields(p_flat):
    """sdf_grad already transposed to (3, M); laplacian (M,)."""
    sdf_grad_t = jax.vmap(jax.grad(density_fn), out_axes=1)(p_flat)               # (3, M)
    lap = jax.vmap(lambda p: jnp.trace(jax.hessian(density_fn)(p)))(p_flat)       # (M,)
    return lap.astype(jnp.float32), sdf_grad_t.astype(jnp.float32)


def _pad_last(x, m_pad):
    m = x.shape[-1]
    if m == m_pad:
        return x
    pad = [(0, 0)] * (x.ndim - 1) + [(0, m_pad - m)]
    return jnp.pad(x, pad)


def _tiling(m, tile_points):
    tile_m = min(int(tile_points), _round_up(m, _VREG))
    tile_m = _round_up(tile_m, _VREG)
    num_steps = -(-m // tile_m)
    m_pad = num_steps * tile_m
    return tile_m, num_steps, m_pad


# --------------------------------- kernels ----------------------------------
def _edge_full_kernel(lap_ref, g_ref, dg_ref, lap_out, err_out):
    """Accumulate (8,128) partials of sum|lap| and sum(normalize(g)-dg)^2."""
    i = pl.program_id(0)

    @pl.when(i == 0)
    def _init():
        lap_out[...] = jnp.zeros_like(lap_out)
        err_out[...] = jnp.zeros_like(err_out)

    lap = lap_ref[...]                 # (tile_r, 128)
    gx = g_ref[0, :, :]
    gy = g_ref[1, :, :]
    gz = g_ref[2, :, :]
    dgx = dg_ref[0, :, :]
    dgy = dg_ref[1, :, :]
    dgz = dg_ref[2, :, :]

    # F.normalize(sdf_grad, dim=2): x * rsqrt(max(||x||^2, eps^2)), eps = 1e-12.
    # rsqrt goes to the EUP slot; all the rest is full-vreg VPU work.
    sq = gx * gx + gy * gy + gz * gz
    inv = lax.rsqrt(jnp.maximum(sq, 1e-24))
    dx = gx * inv - dgx
    dy = gy * inv - dgy
    dz = gz * inv - dgz
    err = dx * dx + dy * dy + dz * dz
    lap_a = jnp.abs(lap)

    # (tile_r,128) -> (tile_r//8, 8, 128) is a layout no-op; the axis-0 sum is
    # vreg-wise VALU adds (no per-step cross-lane XLU reduce, no iota/where).
    tile_r = lap.shape[0]
    lap_out[...] += jnp.sum(lap_a.reshape(tile_r // _SUBLANES, _SUBLANES, _LANES), axis=0)
    err_out[...] += jnp.sum(err.reshape(tile_r // _SUBLANES, _SUBLANES, _LANES), axis=0)


def _edge_lap_kernel(lap_ref, lap_out):
    """Laplacian-only variant (depth_gradients is None): streams 4 B/point."""
    i = pl.program_id(0)

    @pl.when(i == 0)
    def _init():
        lap_out[...] = jnp.zeros_like(lap_out)

    lap_a = jnp.abs(lap_ref[...])
    tile_r = lap_a.shape[0]
    lap_out[...] += jnp.sum(lap_a.reshape(tile_r // _SUBLANES, _SUBLANES, _LANES), axis=0)


# ------------------------------ jitted cores ---------------------------------
@functools.partial(jax.jit, static_argnames=("tile_points",))
def _edge_sums_full(p_flat, dg_flat, *, tile_points):
    """Returns (sum |laplacian|, sum (normalize(sdf_grad) - depth_grad)^2)."""
    m = p_flat.shape[0]
    lap, g_t = _autodiff_fields(p_flat)                       # (M,), (3, M)
    dg_t = dg_flat.astype(jnp.float32).T                      # single (M,3)->(3,M) pass

    tile_m, num_steps, m_pad = _tiling(m, tile_points)
    tile_r = tile_m // _LANES
    r_pad = m_pad // _LANES

    lap2d = _pad_last(lap, m_pad).reshape(r_pad, _LANES)
    g3d = _pad_last(g_t, m_pad).reshape(3, r_pad, _LANES)
    dg3d = _pad_last(dg_t, m_pad).reshape(3, r_pad, _LANES)

    cost = pl.CostEstimate(
        flops=22 * m_pad,
        transcendentals=m_pad,
        bytes_accessed=4 * (7 * m_pad + 2 * _SUBLANES * _LANES))

    lap_blk, err_blk = pl.pallas_call(
        _edge_full_kernel,
        out_shape=(jax.ShapeDtypeStruct((_SUBLANES, _LANES), jnp.float32),
                   jax.ShapeDtypeStruct((_SUBLANES, _LANES), jnp.float32)),
        grid=(num_steps,),
        in_specs=[
            pl.BlockSpec((tile_r, _LANES), lambda i: (i, 0)),
            pl.BlockSpec((3, tile_r, _LANES), lambda i: (0, i, 0)),
            pl.BlockSpec((3, tile_r, _LANES), lambda i: (0, i, 0)),
        ],
        out_specs=(pl.BlockSpec((_SUBLANES, _LANES), lambda i: (0, 0)),
                   pl.BlockSpec((_SUBLANES, _LANES), lambda i: (0, 0))),
        compiler_params=pltpu.CompilerParams(
            dimension_semantics=("arbitrary",),
            vmem_limit_bytes=48 * 1024 * 1024),
        cost_estimate=cost,
    )(lap2d, g3d, dg3d)

    return jnp.sum(lap_blk), jnp.sum(err_blk)


@functools.partial(jax.jit, static_argnames=("tile_points",))
def _edge_sums_lap_only(p_flat, *, tile_points):
    """Returns sum |laplacian| (no gradient-consistency stream at all)."""
    m = p_flat.shape[0]
    lap, _ = _autodiff_fields(p_flat)

    tile_m, num_steps, m_pad = _tiling(m, tile_points)
    tile_r = tile_m // _LANES
    r_pad = m_pad // _LANES

    lap2d = _pad_last(lap, m_pad).reshape(r_pad, _LANES)

    cost = pl.CostEstimate(
        flops=3 * m_pad,
        transcendentals=0,
        bytes_accessed=4 * (m_pad + _SUBLANES * _LANES))

    lap_blk = pl.pallas_call(
        _edge_lap_kernel,
        out_shape=jax.ShapeDtypeStruct((_SUBLANES, _LANES), jnp.float32),
        grid=(num_steps,),
        in_specs=[pl.BlockSpec((tile_r, _LANES), lambda i: (i, 0))],
        out_specs=pl.BlockSpec((_SUBLANES, _LANES), lambda i: (0, 0)),
        compiler_params=pltpu.CompilerParams(
            dimension_semantics=("arbitrary",),
            vmem_limit_bytes=48 * 1024 * 1024),
        cost_estimate=cost,
    )(lap2d)

    return jnp.sum(lap_blk)


# -------------------------------- wrapper ------------------------------------
def edge_aware_loss(points, densities=None, depth_gradients=None,
                    lambda_lap=LAMBDA_LAP, beta_grad=BETA_GRAD,
                    tile_points=None):
    """Mirrors EdgeAwareLoss_.forward(points, densities, depth_gradients).

    `densities` is accepted for API parity but the density graph is the
    synthetic density_fn above (see TODO); sdf_grad and the laplacian come from
    JAX autodiff standing in for torch.autograd.grad.
    Returns (edge_loss, metrics) as jnp scalars (no forced host sync).
    """
    del densities
    B, N, _ = points.shape
    m = B * N
    p_flat = points.reshape(m, 3).astype(jnp.float32)

    if tile_points is None:
        tile_points = _DEFAULT_TILE_POINTS

    if depth_gradients is not None:
        dg_flat = depth_gradients.reshape(m, 3).astype(jnp.float32)
        lap_sum, err_sum = _edge_sums_full(p_flat, dg_flat, tile_points=tile_points)
        gradient_consistency = err_sum / (3.0 * m)
    else:
        lap_sum = _edge_sums_lap_only(p_flat, tile_points=tile_points)
        gradient_consistency = jnp.float32(0.0)

    laplacian_loss = lap_sum / m
    edge_loss = lambda_lap * laplacian_loss + beta_grad * gradient_consistency
    metrics = {
        "laplacian_loss": laplacian_loss,
        "gradient_consistency": gradient_consistency,
    }
    return edge_loss, metrics


# --------------------------------- main --------------------------------------
if __name__ == "__main__":
    key = jax.random.PRNGKey(0)
    kp, kd = jax.random.split(key)

    B, N = 2, 64
    points = jax.random.normal(kp, (B, N, 3), jnp.float32)
    dg = jax.random.normal(kd, (B, N, 3), jnp.float32)
    depth_gradients = dg / jnp.maximum(
        jnp.linalg.norm(dg, axis=2, keepdims=True), 1e-12)

    # Full path (with depth gradients)
    edge_loss, metrics = edge_aware_loss(points, None, depth_gradients)
    edge_loss = jax.block_until_ready(edge_loss)

    # Laplacian-only path (depth_gradients=None)
    edge_loss_lap, metrics_lap = edge_aware_loss(points, None, None)
    edge_loss_lap = jax.block_until_ready(edge_loss_lap)

    # pure-JAX reference
    p_flat = points.reshape(-1, 3)
    sdf_grad = jax.vmap(jax.grad(density_fn))(p_flat).reshape(B, N, 3)
    lap = jax.vmap(lambda p: jnp.trace(jax.hessian(density_fn)(p)))(p_flat)
    lap_loss_ref = jnp.mean(jnp.abs(lap))
    gn = sdf_grad / jnp.maximum(
        jnp.linalg.norm(sdf_grad, axis=2, keepdims=True), 1e-12)
    mse_ref = jnp.mean((gn - depth_gradients) ** 2)
    edge_ref = LAMBDA_LAP * lap_loss_ref + BETA_GRAD * mse_ref
    edge_ref_lap = LAMBDA_LAP * lap_loss_ref

    assert jnp.allclose(edge_loss, edge_ref, rtol=1e-4, atol=1e-5), (edge_loss, edge_ref)
    assert abs(float(metrics["laplacian_loss"]) - float(lap_loss_ref)) < 1e-4
    assert abs(float(metrics["gradient_consistency"]) - float(mse_ref)) < 1e-4
    assert jnp.allclose(edge_loss_lap, edge_ref_lap, rtol=1e-4, atol=1e-5), (
        edge_loss_lap, edge_ref_lap)
    assert float(metrics_lap["gradient_consistency"]) == 0.0

    print("KERNEL_OK")
</pallas_src>

<mosaic_0001>
module attributes {stable_mosaic.version = 11 : i64} {
  func.func @_edge_full_kernel(%arg0: i32, %arg1: memref<8x128xf32, #tpu.memory_space<vmem>>, %arg2: memref<3x8x128xf32, #tpu.memory_space<vmem>>, %arg3: memref<3x8x128xf32, #tpu.memory_space<vmem>>, %arg4: memref<8x128xf32, #tpu.memory_space<vmem>>, %arg5: memref<8x128xf32, #tpu.memory_space<vmem>>) attributes {dimension_semantics = [#tpu.dimension_semantics<arbitrary>], iteration_bounds = array<i64: 1>, scalar_prefetch = 0 : i64, scratch_operands = 0 : i64, tpu.core_type = #tpu.core_type<tc>, window_params = [{transform_indices = @transform_0, window_bounds = array<i64: 8, 128>}, {transform_indices = @transform_1, window_bounds = array<i64: 3, 8, 128>}, {transform_indices = @transform_2, window_bounds = array<i64: 3, 8, 128>}, {pipeline_mode = #tpu.pipeline_mode<synchronous>, transform_indices = @transform_3, window_bounds = array<i64: 8, 128>}, {pipeline_mode = #tpu.pipeline_mode<synchronous>, transform_indices = @transform_4, window_bounds = array<i64: 8, 128>}]} {
    %c0_i32 = arith.constant 0 : i32
    %0 = arith.cmpi eq, %arg0, %c0_i32 : i32
    %1 = arith.extui %0 : i1 to i32
    %c0_i32_0 = arith.constant 0 : i32
    %2 = arith.cmpi ne, %1, %c0_i32_0 : i32
    scf.if %2 {
      %cst_28 = arith.constant 0.000000e+00 : f32
      %46 = vector.broadcast %cst_28 : f32 to vector<8x128xf32>
      %c0_29 = arith.constant 0 : index
      %c0_30 = arith.constant 0 : index
      %47 = vector.load %arg4[%c0_29, %c0_30] : memref<8x128xf32, #tpu.memory_space<vmem>>, vector<8x128xf32>
      tpu.vector_store %arg4[%c0_29, %c0_30], %46 {strides = array<i32>} : memref<8x128xf32, #tpu.memory_space<vmem>>, vector<8x128xf32>,
      %cst_31 = arith.constant 0.000000e+00 : f32
      %48 = vector.broadcast %cst_31 : f32 to vector<8x128xf32>
      %c0_32 = arith.constant 0 : index
      %c0_33 = arith.constant 0 : index
      %49 = vector.load %arg5[%c0_32, %c0_33] : memref<8x128xf32, #tpu.memory_space<vmem>>, vector<8x128xf32>
      tpu.vector_store %arg5[%c0_32, %c0_33], %48 {strides = array<i32>} : memref<8x128xf32, #tpu.memory_space<vmem>>, vector<8x128xf32>,
    } else {
    }
    %c0 = arith.constant 0 : index
    %c0_1 = arith.constant 0 : index
    %3 = vector.load %arg1[%c0, %c0_1] : memref<8x128xf32, #tpu.memory_space<vmem>>, vector<8x128xf32>
    %c0_2 = arith.constant 0 : index
    %c0_3 = arith.constant 0 : index
    %c0_4 = arith.constant 0 : index
    %4 = vector.load %arg2[%c0_2, %c0_3, %c0_4] : memref<3x8x128xf32, #tpu.memory_space<vmem>>, vector<1x8x128xf32>
    %5 = vector.shape_cast %4 : vector<1x8x128xf32> to vector<8x128xf32>
    %c1 = arith.constant 1 : index
    %c0_5 = arith.constant 0 : index
    %c0_6 = arith.constant 0 : index
    %6 = vector.load %arg2[%c1, %c0_5, %c0_6] : memref<3x8x128xf32, #tpu.memory_space<vmem>>, vector<1x8x128xf32>
    %7 = vector.shape_cast %6 : vector<1x8x128xf32> to vector<8x128xf32>
    %c2 = arith.constant 2 : index
    %c0_7 = arith.constant 0 : index
    %c0_8 = arith.constant 0 : index
    %8 = vector.load %arg2[%c2, %c0_7, %c0_8] : memref<3x8x128xf32, #tpu.memory_space<vmem>>, vector<1x8x128xf32>
    %9 = vector.shape_cast %8 : vector<1x8x128xf32> to vector<8x128xf32>
    %c0_9 = arith.constant 0 : index
    %c0_10 = arith.constant 0 : index
    %c0_11 = arith.constant 0 : index
    %10 = vector.load %arg3[%c0_9, %c0_10, %c0_11] : memref<3x8x128xf32, #tpu.memory_space<vmem>>, vector<1x8x128xf32>
    %11 = vector.shape_cast %10 : vector<1x8x128xf32> to vector<8x128xf32>
    %c1_12 = arith.constant 1 : index
    %c0_13 = arith.constant 0 : index
    %c0_14 = arith.constant 0 : index
    %12 = vector.load %arg3[%c1_12, %c0_13, %c0_14] : memref<3x8x128xf32, #tpu.memory_space<vmem>>, vector<1x8x128xf32>
    %13 = vector.shape_cast %12 : vector<1x8x128xf32> to vector<8x128xf32>
    %c2_15 = arith.constant 2 : index
    %c0_16 = arith.constant 0 : index
    %c0_17 = arith.constant 0 : index
    %14 = vector.load %arg3[%c2_15, %c0_16, %c0_17] : memref<3x8x128xf32, #tpu.memory_space<vmem>>, vector<1x8x128xf32>
    %15 = vector.shape_cast %14 : vector<1x8x128xf32> to vector<8x128xf32>
    %16 = arith.mulf %5, %5 : vector<8x128xf32>
    %17 = arith.mulf %7, %7 : vector<8x128xf32>
    %18 = arith.addf %16, %17 : vector<8x128xf32>
    %19 = arith.mulf %9, %9 : vector<8x128xf32>
    %20 = arith.addf %18, %19 : vector<8x128xf32>
    %cst = arith.constant 1.000000e-24 : f32
    %21 = vector.broadcast %cst : f32 to vector<8x128xf32>
    %22 = arith.maximumf %20, %21 : vector<8x128xf32>
    %23 = math.rsqrt %22 : vector<8x128xf32>
    %24 = arith.mulf %5, %23 : vector<8x128xf32>
    %25 = arith.subf %24, %11 : vector<8x128xf32>
    %26 = arith.mulf %7, %23 : vector<8x128xf32>
    %27 = arith.subf %26, %13 : vector<8x128xf32>
    %28 = arith.mulf %9, %23 : vector<8x128xf32>
    %29 = arith.subf %28, %15 : vector<8x128xf32>
    %30 = arith.mulf %25, %25 : vector<8x128xf32>
    %31 = arith.mulf %27, %27 : vector<8x128xf32>
    %32 = arith.addf %30, %31 : vector<8x128xf32>
    %33 = arith.mulf %29, %29 : vector<8x128xf32>
    %34 = arith.addf %32, %33 : vector<8x128xf32>
    %35 = math.absf %3 : vector<8x128xf32>
    %c0_18 = arith.constant 0 : index
    %c0_19 = arith.constant 0 : index
    %36 = vector.load %arg4[%c0_18, %c0_19] : memref<8x128xf32, #tpu.memory_space<vmem>>, vector<8x128xf32>
    %37 = vector.shape_cast %35 : vector<8x128xf32> to vector<1x8x128xf32>
    %cst_20 = arith.constant dense<0.000000e+00> : vector<8x128xf32>
    %38 = vector.multi_reduction <add>, %37, %cst_20 [0] : vector<1x8x128xf32> to vector<8x128xf32>
    %39 = arith.addf %36, %38 : vector<8x128xf32>
    %c0_21 = arith.constant 0 : index
    %c0_22 = arith.constant 0 : index
    %40 = vector.load %arg4[%c0_21, %c0_22] : memref<8x128xf32, #tpu.memory_space<vmem>>, vector<8x128xf32>
    tpu.vector_store %arg4[%c0_21, %c0_22], %39 {strides = array<i32>} : memref<8x128xf32, #tpu.memory_space<vmem>>, vector<8x128xf32>,
    %c0_23 = arith.constant 0 : index
    %c0_24 = arith.constant 0 : index
    %41 = vector.load %arg5[%c0_23, %c0_24] : memref<8x128xf32, #tpu.memory_space<vmem>>, vector<8x128xf32>
    %42 = vector.shape_cast %34 : vector<8x128xf32> to vector<1x8x128xf32>
    %cst_25 = arith.constant dense<0.000000e+00> : vector<8x128xf32>
    %43 = vector.multi_reduction <add>, %42, %cst_25 [0] : vector<1x8x128xf32> to vector<8x128xf32>
    %44 = arith.addf %41, %43 : vector<8x128xf32>
    %c0_26 = arith.constant 0 : index
    %c0_27 = arith.constant 0 : index
    %45 = vector.load %arg5[%c0_26, %c0_27] : memref<8x128xf32, #tpu.memory_space<vmem>>, vector<8x128xf32>
    tpu.vector_store %arg5[%c0_26, %c0_27], %44 {strides = array<i32>} : memref<8x128xf32, #tpu.memory_space<vmem>>, vector<8x128xf32>,
    return
  }
  func.func @transform_0(%arg0: i32) -> (i32, i32) {
    %c0_i32 = arith.constant 0 : i32
    %c0_i32_0 = arith.constant 0 : i32
    return %arg0, %c0_i32 : i32, i32
  }
  func.func @transform_1(%arg0: i32) -> (i32, i32, i32) {
    %c0_i32 = arith.constant 0 : i32
    %c0_i32_0 = arith.constant 0 : i32
    %c0_i32_1 = arith.constant 0 : i32
    return %c0_i32, %arg0, %c0_i32_0 : i32, i32, i32
  }
  func.func @transform_2(%arg0: i32) -> (i32, i32, i32) {
    %c0_i32 = arith.constant 0 : i32
    %c0_i32_0 = arith.constant 0 : i32
    %c0_i32_1 = arith.constant 0 : i32
    return %c0_i32, %arg0, %c0_i32_0 : i32, i32, i32
  }
  func.func @transform_3(%arg0: i32) -> (i32, i32) {
    %c0_i32 = arith.constant 0 : i32
    %c0_i32_0 = arith.constant 0 : i32
    %c0_i32_1 = arith.constant 0 : i32
    return %c0_i32, %c0_i32_0 : i32, i32
  }
  func.func @transform_4(%arg0: i32) -> (i32, i32) {
    %c0_i32 = arith.constant 0 : i32
    %c0_i32_0 = arith.constant 0 : i32
    %c0_i32_1 = arith.constant 0 : i32
    return %c0_i32, %c0_i32_0 : i32, i32
  }
}

</mosaic_0001>

<llo_original>
// kernel: _edge_sums_full.1
$region0: #{_edge_sums_full.1}
  #allocation0 [shape = 'u32[]', space=smem, size = 0x4, offset = 0x4, fixed_abs, tag = 'smem constant byte address 0x4 - core index']
  #allocation1 [shape = 'u32[144,128]{1,0:T(1,128)}', space=vmem, size = 0x12000, scoped, tag = 'internal scratch']
  %s0 = inlined_call_operand.vmem [shape: f32[8,128], index: 0, kind: input, shape index: {}]
  %s1 = inlined_call_operand.vmem [shape: f32[3,8,128], index: 1, kind: input, shape index: {}]
  %s2 = inlined_call_operand.vmem [shape: f32[3,8,128], index: 2, kind: input, shape index: {}]
  %s3 = inlined_call_operand.vmem [shape: f32[8,128], index: 3, kind: output, shape index: {0}]
  %s4 = inlined_call_operand.vmem [shape: f32[8,128], index: 4, kind: output, shape index: {1}]
  %5 = xla_tuple %s3, %s4
  %s6 = sld [smem:[#allocation0]]
  $region34: #{_edge_sums_full.1} parent=0
    _
  %s8 = ssub.s32 1, %s6
  %s9 = scalar_select 0, %s8, %s6
  // Predicated region
  $region2: #{_edge_sums_full.1} parent=0 // pred_check
    _
  $region3: #{_edge_sums_full.1} parent=0 // pred_check_branch
    %11 = sbr.rel (0) target = $region5
  $region4: #{_edge_sums_full.1} parent=0 // pred_region
    _
  $region5: #{_edge_sums_full.1} parent=0 // pred_fallthru
    _
  // Predicated region
  $region6: #{_edge_sums_full.1} parent=0 // pred_check
    _
  $region7: #{_edge_sums_full.1} parent=0 // pred_check_branch
    %13 = sbr.rel (0) target = $region9
  $region8: #{_edge_sums_full.1} parent=0 // pred_region
    _
  $region9: #{_edge_sums_full.1} parent=0 // pred_fallthru
    _
  // Predicated region
  $region10: #{_edge_sums_full.1} parent=0 // pred_check
    _
  $region11: #{_edge_sums_full.1} parent=0 // pred_check_branch
    %15 = sbr.rel (0) target = $region13
  $region12: #{_edge_sums_full.1} parent=0 // pred_region
    _
  $region13: #{_edge_sums_full.1} parent=0 // pred_fallthru
    _
  %p16 = scmp.eq.s32.totalorder 0, 0
  // Predicated region
  $region14: #{_edge_sums_full.1} parent=0 // pred_check
    %p17 = pneg %p16
  $region15: #{_edge_sums_full.1} parent=0 // pred_check_branch
    %19 = sbr.rel (%p17) target = $region17
  $region16: #{_edge_sums_full.1} parent=0 // pred_region
    %20 = vst [vmem:[%s3] sm:$0xff] 0.0
    %21 = vst [vmem:[%s4] sm:$0xff] 0.0
  $region17: #{_edge_sums_full.1} parent=0 // pred_fallthru
    _
  %v22 = vld [vmem:[%s0] sm:$0xff]
  %v23 = vld [vmem:[%s1] sm:$0xff]
  %s24 = scalar_lea.vmem %s1, 8
  %v25 = vld [vmem:[%s24] sm:$0xff]
  %s26 = scalar_lea.vmem %s1, 16
  %v27 = vld [vmem:[%s26] sm:$0xff]
  %v28 = vld [vmem:[%s2] sm:$0xff]
  %s29 = scalar_lea.vmem %s2, 8
  %v30 = vld [vmem:[%s29] sm:$0xff]
  %s31 = scalar_lea.vmem %s2, 16
  %v32 = vld [vmem:[%s31] sm:$0xff]
  %v33 = vmul.f32 %v23, %v23
  %v34 = vmul.f32 %v25, %v25
  %v35 = vadd.f32 %v33, %v34
  %v36 = vmul.f32 %v27, %v27
  %v37 = vadd.f32 %v35, %v36
  %v38 = vmax.f32 %v37, 1e-24
  %v39 = vrsqrt.pop %v38
  %v40 = vmul.f32 %v23, %v39
  %v41 = vsub.f32 %v40, %v28
  %v42 = vmul.f32 %v25, %v39
  %v43 = vsub.f32 %v42, %v30
  %v44 = vmul.f32 %v27, %v39
  %v45 = vsub.f32 %v44, %v32
  %v46 = vmul.f32 %v41, %v41
  %v47 = vmul.f32 %v43, %v43
  %v48 = vadd.f32 %v46, %v47
  %v49 = vmul.f32 %v45, %v45
  %v50 = vadd.f32 %v48, %v49
  %v51 = vand.u32 2147483647, %v22
  %v52 = vld [vmem:[%s3] sm:$0xff]
  %v53 = vadd.f32 %v51, 0.0
  %v54 = vadd.f32 %v52, %v53
  %55 = vst [vmem:[%s3] sm:$0xff] %v54
  %v56 = vld [vmem:[%s4] sm:$0xff]
  %v57 = vadd.f32 %v50, 0.0
  %v58 = vadd.f32 %v56, %v57
  %59 = vst [vmem:[%s4] sm:$0xff] %v58
  // Predicated region
  $region18: #{_edge_sums_full.1} parent=0 // pred_check
    _
  $region19: #{_edge_sums_full.1} parent=0 // pred_check_branch
    %61 = sbr.rel (0) target = $region21
  $region20: #{_edge_sums_full.1} parent=0 // pred_region
    _
  $region21: #{_edge_sums_full.1} parent=0 // pred_fallthru
    _
  // Predicated region
  $region22: #{_edge_sums_full.1} parent=0 // pred_check
    _
  $region23: #{_edge_sums_full.1} parent=0 // pred_check_branch
    %63 = sbr.rel (0) target = $region25
  $region24: #{_edge_sums_full.1} parent=0 // pred_region
    _
  $region25: #{_edge_sums_full.1} parent=0 // pred_fallthru
    _
  // Predicated region
  $region26: #{_edge_sums_full.1} parent=0 // pred_check
    _
  $region27: #{_edge_sums_full.1} parent=0 // pred_check_branch
    %65 = sbr.rel (0) target = $region29
  $region28: #{_edge_sums_full.1} parent=0 // pred_region
    _
  $region29: #{_edge_sums_full.1} parent=0 // pred_fallthru
    _
  // Predicated region
  $region30: #{_edge_sums_full.1} parent=0 // pred_check
    _
  $region31: #{_edge_sums_full.1} parent=0 // pred_check_branch
    %67 = sbr.rel (0) target = $region33
  $region32: #{_edge_sums_full.1} parent=0 // pred_region
    _
  $region33: #{_edge_sums_full.1} parent=0 // pred_fallthru
    _

</llo_original>
